<compile_context>
chip_gen: v7x
topology: tpu7x:2x2x1
jax: 0.10.0
libtpu: 0.0.40
codegen_flags: <defaults>
</compile_context>

<pallas_src>
import functools

import jax
import jax.numpy as jnp
from jax import lax
from jax.experimental import pallas as pl
from jax.experimental.pallas import tpu as pltpu


def _round_up(x, m):
    return (x + m - 1) // m * m


def _vmem_capacity_bytes():
    """Best-effort per-core VMEM capacity; conservative fallback (v7x-class)."""
    try:
        info = pltpu.get_tpu_info()
        cap = int(getattr(info, "vmem_capacity_bytes", 0))
        if cap > 0:
            return cap
    except Exception:
        pass
    return 64 * 1024 * 1024


def snn_readout_kernel(x_ref, w_ref, o_ref, flt_state_ref, out_state_ref, *,
                       alpha, beta, unroll, carry_in_regs):
    # x_ref          : (t_chunk, b_tile, d_pad)  bf16   time-major input tile
    # w_ref          : (o_pad, d_pad)            bf16   resident weight
    # o_ref          : (t_chunk, b_tile, o_pad)  bf16/f32 time-major output tile
    # flt_state_ref / out_state_ref : (b_tile, o_pad) f32 recurrence state,
    #   persistent across time chunks (time axis is the last, "arbitrary" grid
    #   axis, so all chunks of one batch tile run back-to-back on one core).
    t_chunk = x_ref.shape[0]

    # Reset the recurrence state at the first time chunk of each batch tile.
    @pl.when(pl.program_id(1) == 0)
    def _():
        flt_state_ref[...] = jnp.zeros_like(flt_state_ref)
        out_state_ref[...] = jnp.zeros_like(out_state_ref)

    w = w_ref[...]  # (o_pad, d_pad) bf16

    def step(t, carry):
        if carry_in_regs:
            flt, out = carry
        else:
            flt = flt_state_ref[...]
            out = out_state_ref[...]
        # Uses the PRE-update flt (matches the PyTorch loop ordering).
        new_out = beta * out + flt
        o_ref[t] = new_out.astype(o_ref.dtype)          # dense (b_tile, o_pad) store
        # Fused per-step matmul: (b_tile, d_pad) . (o_pad, d_pad)^T, f32 accum.
        h_t = lax.dot_general(
            x_ref[t], w,
            dimension_numbers=(((1,), (1,)), ((), ())),
            preferred_element_type=jnp.float32,
        )
        new_flt = alpha * flt + h_t
        if carry_in_regs:
            return new_flt, new_out
        flt_state_ref[...] = new_flt
        out_state_ref[...] = new_out
        return carry

    if carry_in_regs:
        flt, out = lax.fori_loop(
            0, t_chunk, step,
            (flt_state_ref[...], out_state_ref[...]),
            unroll=unroll,
        )
        flt_state_ref[...] = flt
        out_state_ref[...] = out
    else:
        lax.fori_loop(0, t_chunk, step, 0, unroll=unroll)


@functools.partial(
    jax.jit,
    static_argnames=("alpha", "beta", "nb_steps", "b_tile", "t_chunk",
                     "store_bf16_output"),
)
def snn_readout_forward(inputs, weight, *, alpha, beta, nb_steps,
                        b_tile=None, t_chunk=None, store_bf16_output=True):
    """inputs: (B, T, D_in), weight: (O, D_in) -> (B, T, O) f32.

    Note: MXU inputs are cast to bf16 (f32 accumulation) and, by default, the
    per-step outputs are stored as bf16 and upcast to f32 in the wrapper;
    expect ~1e-3..1e-2 relative error vs a pure-f32 PyTorch run.  Pass
    store_bf16_output=False to keep the f32 output path.
    """
    batch, steps, d_in = inputs.shape
    out_size, d_in_w = weight.shape
    assert steps == int(nb_steps) and d_in_w == d_in

    d_pad = _round_up(d_in, 128)      # lane dim of LHS / contraction
    o_pad = _round_up(out_size, 128)  # lane dim of output
    out_dtype = jnp.bfloat16 if store_bf16_output else jnp.float32
    out_bytes = 2 if store_bf16_output else 4

    # Per-generation VMEM budgeting (v5e/v6e: 128 MiB, 1 TC; v7x: 64 MiB, 2 TC).
    vmem_cap = _vmem_capacity_bytes()
    small_vmem = vmem_cap <= 64 * 1024 * 1024
    if small_vmem:                       # v7x-class
        vmem_budget = 28 * 1024 * 1024
        vmem_limit = 40 * 1024 * 1024
        t_cap = 64
    else:                                # v5e / v6e-class
        vmem_budget = 80 * 1024 * 1024
        vmem_limit = 96 * 1024 * 1024
        t_cap = 128

    if b_tile is None:
        b_tile = min(_round_up(batch, 16), 128)   # sublane dim, bf16-friendly
        # vreg-pressure guard: the in-register recurrence carry is
        # flt + out + new_out + h_t, each b_tile*o_pad f32.
        b_tile = min(b_tile, max(16, (128 * 128) // o_pad // 16 * 16))
        # v7x: keep >= 2 batch tiles so both TensorCores get work on the
        # "parallel" axis (v5e/v6e have a single TensorCore).
        if small_vmem and b_tile > 16 and _round_up(batch, b_tile) // b_tile < 2:
            b_tile = max(16, _round_up(b_tile // 2, 16))
    if t_chunk is None:
        t_chunk = min(_round_up(steps, 8), t_cap)

    # Resident weight: single-buffer it when big enough to matter (its
    # index_map is constant, so a second buffer is pure VMEM waste).
    # TODO(synk): for very large O*D (weight approaching the VMEM budget) add a
    # K/N grid axis instead of keeping W fully resident.
    w_bytes = o_pad * d_pad * 2
    w_index_map = lambda b, t: (0, 0)
    w_bufs = 2
    w_spec = pl.BlockSpec((o_pad, d_pad), w_index_map)
    if w_bytes > (1 << 20):
        try:
            w_spec = pl.BlockSpec((o_pad, d_pad), w_index_map,
                                  pipeline_mode=pl.Buffered(1))
            w_bufs = 1
        except (TypeError, AttributeError):
            pass  # older BlockSpec signature: keep the double-buffered spec

    def vmem_bytes(bt, tc):
        return (2 * tc * bt * d_pad * 2          # x tile, bf16, double buffered
                + 2 * tc * bt * o_pad * out_bytes  # y tile, double buffered
                + w_bufs * w_bytes               # resident weight
                + 2 * bt * o_pad * 4)            # flt / out state scratch

    # Shrink tiles until the working set fits the per-generation budget.
    while vmem_bytes(b_tile, t_chunk) > vmem_budget and t_chunk > 16:
        t_chunk = max(16, t_chunk // 2)
    while vmem_bytes(b_tile, t_chunk) > vmem_budget and b_tile > 16:
        b_tile = max(16, _round_up(b_tile // 2, 16))
    while vmem_bytes(b_tile, t_chunk) > vmem_budget and t_chunk > 8:
        t_chunk = max(8, t_chunk // 2)

    b_pad = _round_up(batch, b_tile)
    t_pad = _round_up(steps, t_chunk)

    # Layout plumbing (fused by XLA with the unavoidable pad / bf16-cast pass
    # since this wrapper is jitted): go time-major so every per-step slab in
    # the kernel is lane-dense.
    x_tm = jnp.transpose(inputs, (1, 0, 2))                        # (T, B, D)
    x_p = jnp.pad(x_tm, ((0, t_pad - steps), (0, b_pad - batch),
                         (0, d_pad - d_in))).astype(jnp.bfloat16)
    w_p = jnp.pad(weight, ((0, o_pad - out_size),
                           (0, d_pad - d_in))).astype(jnp.bfloat16)

    grid = (b_pad // b_tile, t_pad // t_chunk)
    carry_in_regs = (b_tile * o_pad) <= 128 * 128
    unroll = t_chunk if t_chunk <= 8 else 4

    kernel = functools.partial(
        snn_readout_kernel,
        alpha=float(alpha), beta=float(beta),
        unroll=unroll, carry_in_regs=carry_in_regs,
    )

    flops = 2 * b_pad * t_pad * d_pad * o_pad
    bytes_accessed = (x_p.size * 2 + w_p.size * 2
                      + t_pad * b_pad * o_pad * out_bytes)

    y_p = pl.pallas_call(
        kernel,
        out_shape=jax.ShapeDtypeStruct((t_pad, b_pad, o_pad), out_dtype),
        grid_spec=pltpu.PrefetchScalarGridSpec(
            num_scalar_prefetch=0,
            grid=grid,
            in_specs=[
                pl.BlockSpec((t_chunk, b_tile, d_pad), lambda b, t: (t, b, 0)),
                w_spec,
            ],
            out_specs=pl.BlockSpec((t_chunk, b_tile, o_pad),
                                   lambda b, t: (t, b, 0)),
            scratch_shapes=[
                pltpu.VMEM((b_tile, o_pad), jnp.float32),   # flt state
                pltpu.VMEM((b_tile, o_pad), jnp.float32),   # out state
            ],
        ),
        # Time axis MUST stay last and "arbitrary": the state scratch carries
        # across time chunks of one batch tile.  Batch axis is "parallel"
        # (megacore-shardable on v7x).
        compiler_params=pltpu.CompilerParams(
            dimension_semantics=("parallel", "arbitrary"),
            vmem_limit_bytes=vmem_limit,
        ),
        cost_estimate=pl.CostEstimate(
            flops=int(flops), transcendentals=0,
            bytes_accessed=int(bytes_accessed)),
    )(x_p, w_p)

    # Back to (B, T, O) f32, drop padding (fuses with the bf16 -> f32 upcast).
    return jnp.transpose(y_p, (1, 0, 2))[:batch, :steps, :out_size].astype(
        jnp.float32)


def snn_readout_reference(inputs, weight, alpha, beta, nb_steps, *,
                          matmul_bf16=False, round_out_bf16=False):
    """Pure-JAX reference mirroring the PyTorch forward."""
    batch = inputs.shape[0]
    out_size = weight.shape[0]
    if matmul_bf16:
        h = lax.dot_general(
            inputs.astype(jnp.bfloat16), weight.astype(jnp.bfloat16),
            dimension_numbers=(((2,), (1,)), ((), ())),
            preferred_element_type=jnp.float32)
    else:
        h = jnp.einsum("btd,od->bto", inputs, weight,
                       preferred_element_type=jnp.float32)
    flt = jnp.zeros((batch, out_size), jnp.float32)
    out = jnp.zeros((batch, out_size), jnp.float32)
    rec = []
    for t in range(int(nb_steps)):
        new_flt = alpha * flt + h[:, t]
        new_out = beta * out + flt
        stored = new_out
        if round_out_bf16:
            stored = stored.astype(jnp.bfloat16).astype(jnp.float32)
        rec.append(stored)
        flt = new_flt
        out = new_out
    return jnp.stack(rec, axis=1)


if __name__ == "__main__":
    batch = 2
    nb_steps = 8
    input_size = 32
    output_size = 16
    alpha = 0.95
    beta = 0.90

    key = jax.random.PRNGKey(0)
    kx, kw = jax.random.split(key)
    x = jax.random.normal(kx, (batch, nb_steps, input_size), dtype=jnp.float32)
    bound = 1.0 / (input_size ** 0.5)
    w = jax.random.uniform(
        kw, (output_size, input_size), minval=-bound, maxval=bound,
        dtype=jnp.float32)

    y = snn_readout_forward(x, w, alpha=alpha, beta=beta, nb_steps=nb_steps)
    y = jax.block_until_ready(y)
    assert y.shape == (batch, nb_steps, output_size)
    assert y.dtype == jnp.float32

    # Precision-matched check (bf16 matmul inputs + bf16-rounded stores, f32
    # recurrence): validates the recurrence/store logic tightly.
    y_ref_matched = snn_readout_reference(
        x, w, alpha, beta, nb_steps, matmul_bf16=True, round_out_bf16=True)
    assert jnp.allclose(y, y_ref_matched, atol=2e-2, rtol=2e-2), \
        "mismatch vs precision-matched reference"

    # Loose check against the full-f32 PyTorch-equivalent reference (bf16 MXU
    # inputs + bf16 output storage introduce ~1e-3..1e-2 relative error).
    y_ref_f32 = snn_readout_reference(x, w, alpha, beta, nb_steps)
    assert jnp.allclose(y, y_ref_f32, atol=5e-2, rtol=5e-2), \
        "mismatch vs f32 reference"

    print("KERNEL_OK")
</pallas_src>

<mosaic_0001>
module attributes {stable_mosaic.version = 11 : i64} {
  func.func @snn_readout_kernel(%arg0: i32, %arg1: i32, %arg2: memref<8x16x128xbf16, #tpu.memory_space<vmem>>, %arg3: memref<128x128xbf16, #tpu.memory_space<vmem>>, %arg4: memref<8x16x128xbf16, #tpu.memory_space<vmem>>, %arg5: memref<16x128xf32, #tpu.memory_space<vmem>>, %arg6: memref<16x128xf32, #tpu.memory_space<vmem>>) attributes {dimension_semantics = [#tpu.dimension_semantics<parallel>, #tpu.dimension_semantics<arbitrary>], iteration_bounds = array<i64: 1, 1>, scalar_prefetch = 0 : i64, scratch_operands = 2 : i64, tpu.core_type = #tpu.core_type<tc>, window_params = [{transform_indices = @transform_0, window_bounds = array<i64: 8, 16, 128>}, {pipeline_mode = #tpu.pipeline_mode<synchronous>, transform_indices = @transform_1, window_bounds = array<i64: 128, 128>}, {transform_indices = @transform_2, window_bounds = array<i64: 8, 16, 128>}]} {
    %c0_i32 = arith.constant 0 : i32
    %0 = arith.cmpi eq, %arg1, %c0_i32 : i32
    %1 = arith.extui %0 : i1 to i32
    %c0_i32_0 = arith.constant 0 : i32
    %2 = arith.cmpi ne, %1, %c0_i32_0 : i32
    scf.if %2 {
      %cst_66 = arith.constant 0.000000e+00 : f32
      %128 = vector.broadcast %cst_66 : f32 to vector<16x128xf32>
      %c0_67 = arith.constant 0 : index
      %c0_68 = arith.constant 0 : index
      %129 = vector.load %arg5[%c0_67, %c0_68] : memref<16x128xf32, #tpu.memory_space<vmem>>, vector<16x128xf32>
      tpu.vector_store %arg5[%c0_67, %c0_68], %128 {strides = array<i32>} : memref<16x128xf32, #tpu.memory_space<vmem>>, vector<16x128xf32>,
      %cst_69 = arith.constant 0.000000e+00 : f32
      %130 = vector.broadcast %cst_69 : f32 to vector<16x128xf32>
      %c0_70 = arith.constant 0 : index
      %c0_71 = arith.constant 0 : index
      %131 = vector.load %arg6[%c0_70, %c0_71] : memref<16x128xf32, #tpu.memory_space<vmem>>, vector<16x128xf32>
      tpu.vector_store %arg6[%c0_70, %c0_71], %130 {strides = array<i32>} : memref<16x128xf32, #tpu.memory_space<vmem>>, vector<16x128xf32>,
    } else {
    }
    %c0 = arith.constant 0 : index
    %c0_1 = arith.constant 0 : index
    %3 = vector.load %arg3[%c0, %c0_1] : memref<128x128xbf16, #tpu.memory_space<vmem>>, vector<128x128xbf16>
    %c0_2 = arith.constant 0 : index
    %c0_3 = arith.constant 0 : index
    %4 = vector.load %arg5[%c0_2, %c0_3] : memref<16x128xf32, #tpu.memory_space<vmem>>, vector<16x128xf32>
    %c0_4 = arith.constant 0 : index
    %c0_5 = arith.constant 0 : index
    %5 = vector.load %arg6[%c0_4, %c0_5] : memref<16x128xf32, #tpu.memory_space<vmem>>, vector<16x128xf32>
    %c0_i32_6 = arith.constant 0 : i32
    %cst = arith.constant 0.899999976 : f32
    %6 = vector.broadcast %cst : f32 to vector<16x128xf32>
    %7 = arith.mulf %6, %5 : vector<16x128xf32>
    %8 = arith.addf %7, %4 : vector<16x128xf32>
    %9 = arith.truncf %8 : vector<16x128xf32> to vector<16x128xbf16>
    %10 = arith.index_cast %c0_i32_6 : i32 to index
    %c0_7 = arith.constant 0 : index
    %c0_8 = arith.constant 0 : index
    %11 = vector.load %arg4[%10, %c0_7, %c0_8] : memref<8x16x128xbf16, #tpu.memory_space<vmem>>, vector<1x16x128xbf16>
    %12 = vector.shape_cast %11 : vector<1x16x128xbf16> to vector<16x128xbf16>
    %13 = vector.shape_cast %9 : vector<16x128xbf16> to vector<1x16x128xbf16>
    tpu.vector_store %arg4[%10, %c0_7, %c0_8], %13 {strides = array<i32>} : memref<8x16x128xbf16, #tpu.memory_space<vmem>>, vector<1x16x128xbf16>,
    %14 = arith.index_cast %c0_i32_6 : i32 to index
    %c0_9 = arith.constant 0 : index
    %c0_10 = arith.constant 0 : index
    %15 = vector.load %arg2[%14, %c0_9, %c0_10] : memref<8x16x128xbf16, #tpu.memory_space<vmem>>, vector<1x16x128xbf16>
    %16 = vector.shape_cast %15 : vector<1x16x128xbf16> to vector<16x128xbf16>
    %cst_11 = arith.constant dense<0.000000e+00> : vector<16x128xf32>
    %17 = tpu.matmul %16, %3, %cst_11 {dimension_numbers = #tpu.dot_dimension_numbers<[1], [1], [0], [0], [0, 0, 1, 0], [], []>} : vector<16x128xbf16>, vector<128x128xbf16>, vector<16x128xf32> -> vector<16x128xf32>
    %cst_12 = arith.constant 0.949999988 : f32
    %18 = vector.broadcast %cst_12 : f32 to vector<16x128xf32>
    %19 = arith.mulf %18, %4 : vector<16x128xf32>
    %20 = arith.addf %19, %17 : vector<16x128xf32>
    %c1_i32 = arith.constant 1 : i32
    %cst_13 = arith.constant 0.899999976 : f32
    %21 = vector.broadcast %cst_13 : f32 to vector<16x128xf32>
    %22 = arith.mulf %21, %8 : vector<16x128xf32>
    %23 = arith.addf %22, %20 : vector<16x128xf32>
    %24 = arith.truncf %23 : vector<16x128xf32> to vector<16x128xbf16>
    %25 = arith.index_cast %c1_i32 : i32 to index
    %c0_14 = arith.constant 0 : index
    %c0_15 = arith.constant 0 : index
    %26 = vector.load %arg4[%25, %c0_14, %c0_15] : memref<8x16x128xbf16, #tpu.memory_space<vmem>>, vector<1x16x128xbf16>
    %27 = vector.shape_cast %26 : vector<1x16x128xbf16> to vector<16x128xbf16>
    %28 = vector.shape_cast %24 : vector<16x128xbf16> to vector<1x16x128xbf16>
    tpu.vector_store %arg4[%25, %c0_14, %c0_15], %28 {strides = array<i32>} : memref<8x16x128xbf16, #tpu.memory_space<vmem>>, vector<1x16x128xbf16>,
    %29 = arith.index_cast %c1_i32 : i32 to index
    %c0_16 = arith.constant 0 : index
    %c0_17 = arith.constant 0 : index
    %30 = vector.load %arg2[%29, %c0_16, %c0_17] : memref<8x16x128xbf16, #tpu.memory_space<vmem>>, vector<1x16x128xbf16>
    %31 = vector.shape_cast %30 : vector<1x16x128xbf16> to vector<16x128xbf16>
    %cst_18 = arith.constant dense<0.000000e+00> : vector<16x128xf32>
    %32 = tpu.matmul %31, %3, %cst_18 {dimension_numbers = #tpu.dot_dimension_numbers<[1], [1], [0], [0], [0, 0, 1, 0], [], []>} : vector<16x128xbf16>, vector<128x128xbf16>, vector<16x128xf32> -> vector<16x128xf32>
    %cst_19 = arith.constant 0.949999988 : f32
    %33 = vector.broadcast %cst_19 : f32 to vector<16x128xf32>
    %34 = arith.mulf %33, %20 : vector<16x128xf32>
    %35 = arith.addf %34, %32 : vector<16x128xf32>
    %c2_i32 = arith.constant 2 : i32
    %cst_20 = arith.constant 0.899999976 : f32
    %36 = vector.broadcast %cst_20 : f32 to vector<16x128xf32>
    %37 = arith.mulf %36, %23 : vector<16x128xf32>
    %38 = arith.addf %37, %35 : vector<16x128xf32>
    %39 = arith.truncf %38 : vector<16x128xf32> to vector<16x128xbf16>
    %40 = arith.index_cast %c2_i32 : i32 to index
    %c0_21 = arith.constant 0 : index
    %c0_22 = arith.constant 0 : index
    %41 = vector.load %arg4[%40, %c0_21, %c0_22] : memref<8x16x128xbf16, #tpu.memory_space<vmem>>, vector<1x16x128xbf16>
    %42 = vector.shape_cast %41 : vector<1x16x128xbf16> to vector<16x128xbf16>
    %43 = vector.shape_cast %39 : vector<16x128xbf16> to vector<1x16x128xbf16>
    tpu.vector_store %arg4[%40, %c0_21, %c0_22], %43 {strides = array<i32>} : memref<8x16x128xbf16, #tpu.memory_space<vmem>>, vector<1x16x128xbf16>,
    %44 = arith.index_cast %c2_i32 : i32 to index
    %c0_23 = arith.constant 0 : index
    %c0_24 = arith.constant 0 : index
    %45 = vector.load %arg2[%44, %c0_23, %c0_24] : memref<8x16x128xbf16, #tpu.memory_space<vmem>>, vector<1x16x128xbf16>
    %46 = vector.shape_cast %45 : vector<1x16x128xbf16> to vector<16x128xbf16>
    %cst_25 = arith.constant dense<0.000000e+00> : vector<16x128xf32>
    %47 = tpu.matmul %46, %3, %cst_25 {dimension_numbers = #tpu.dot_dimension_numbers<[1], [1], [0], [0], [0, 0, 1, 0], [], []>} : vector<16x128xbf16>, vector<128x128xbf16>, vector<16x128xf32> -> vector<16x128xf32>
    %cst_26 = arith.constant 0.949999988 : f32
    %48 = vector.broadcast %cst_26 : f32 to vector<16x128xf32>
    %49 = arith.mulf %48, %35 : vector<16x128xf32>
    %50 = arith.addf %49, %47 : vector<16x128xf32>
    %c3_i32 = arith.constant 3 : i32
    %cst_27 = arith.constant 0.899999976 : f32
    %51 = vector.broadcast %cst_27 : f32 to vector<16x128xf32>
    %52 = arith.mulf %51, %38 : vector<16x128xf32>
    %53 = arith.addf %52, %50 : vector<16x128xf32>
    %54 = arith.truncf %53 : vector<16x128xf32> to vector<16x128xbf16>
    %55 = arith.index_cast %c3_i32 : i32 to index
    %c0_28 = arith.constant 0 : index
    %c0_29 = arith.constant 0 : index
    %56 = vector.load %arg4[%55, %c0_28, %c0_29] : memref<8x16x128xbf16, #tpu.memory_space<vmem>>, vector<1x16x128xbf16>
    %57 = vector.shape_cast %56 : vector<1x16x128xbf16> to vector<16x128xbf16>
    %58 = vector.shape_cast %54 : vector<16x128xbf16> to vector<1x16x128xbf16>
    tpu.vector_store %arg4[%55, %c0_28, %c0_29], %58 {strides = array<i32>} : memref<8x16x128xbf16, #tpu.memory_space<vmem>>, vector<1x16x128xbf16>,
    %59 = arith.index_cast %c3_i32 : i32 to index
    %c0_30 = arith.constant 0 : index
    %c0_31 = arith.constant 0 : index
    %60 = vector.load %arg2[%59, %c0_30, %c0_31] : memref<8x16x128xbf16, #tpu.memory_space<vmem>>, vector<1x16x128xbf16>
    %61 = vector.shape_cast %60 : vector<1x16x128xbf16> to vector<16x128xbf16>
    %cst_32 = arith.constant dense<0.000000e+00> : vector<16x128xf32>
    %62 = tpu.matmul %61, %3, %cst_32 {dimension_numbers = #tpu.dot_dimension_numbers<[1], [1], [0], [0], [0, 0, 1, 0], [], []>} : vector<16x128xbf16>, vector<128x128xbf16>, vector<16x128xf32> -> vector<16x128xf32>
    %cst_33 = arith.constant 0.949999988 : f32
    %63 = vector.broadcast %cst_33 : f32 to vector<16x128xf32>
    %64 = arith.mulf %63, %50 : vector<16x128xf32>
    %65 = arith.addf %64, %62 : vector<16x128xf32>
    %c4_i32 = arith.constant 4 : i32
    %cst_34 = arith.constant 0.899999976 : f32
    %66 = vector.broadcast %cst_34 : f32 to vector<16x128xf32>
    %67 = arith.mulf %66, %53 : vector<16x128xf32>
    %68 = arith.addf %67, %65 : vector<16x128xf32>
    %69 = arith.truncf %68 : vector<16x128xf32> to vector<16x128xbf16>
    %70 = arith.index_cast %c4_i32 : i32 to index
    %c0_35 = arith.constant 0 : index
    %c0_36 = arith.constant 0 : index
    %71 = vector.load %arg4[%70, %c0_35, %c0_36] : memref<8x16x128xbf16, #tpu.memory_space<vmem>>, vector<1x16x128xbf16>
    %72 = vector.shape_cast %71 : vector<1x16x128xbf16> to vector<16x128xbf16>
    %73 = vector.shape_cast %69 : vector<16x128xbf16> to vector<1x16x128xbf16>
    tpu.vector_store %arg4[%70, %c0_35, %c0_36], %73 {strides = array<i32>} : memref<8x16x128xbf16, #tpu.memory_space<vmem>>, vector<1x16x128xbf16>,
    %74 = arith.index_cast %c4_i32 : i32 to index
    %c0_37 = arith.constant 0 : index
    %c0_38 = arith.constant 0 : index
    %75 = vector.load %arg2[%74, %c0_37, %c0_38] : memref<8x16x128xbf16, #tpu.memory_space<vmem>>, vector<1x16x128xbf16>
    %76 = vector.shape_cast %75 : vector<1x16x128xbf16> to vector<16x128xbf16>
    %cst_39 = arith.constant dense<0.000000e+00> : vector<16x128xf32>
    %77 = tpu.matmul %76, %3, %cst_39 {dimension_numbers = #tpu.dot_dimension_numbers<[1], [1], [0], [0], [0, 0, 1, 0], [], []>} : vector<16x128xbf16>, vector<128x128xbf16>, vector<16x128xf32> -> vector<16x128xf32>
    %cst_40 = arith.constant 0.949999988 : f32
    %78 = vector.broadcast %cst_40 : f32 to vector<16x128xf32>
    %79 = arith.mulf %78, %65 : vector<16x128xf32>
    %80 = arith.addf %79, %77 : vector<16x128xf32>
    %c5_i32 = arith.constant 5 : i32
    %cst_41 = arith.constant 0.899999976 : f32
    %81 = vector.broadcast %cst_41 : f32 to vector<16x128xf32>
    %82 = arith.mulf %81, %68 : vector<16x128xf32>
    %83 = arith.addf %82, %80 : vector<16x128xf32>
    %84 = arith.truncf %83 : vector<16x128xf32> to vector<16x128xbf16>
    %85 = arith.index_cast %c5_i32 : i32 to index
    %c0_42 = arith.constant 0 : index
    %c0_43 = arith.constant 0 : index
    %86 = vector.load %arg4[%85, %c0_42, %c0_43] : memref<8x16x128xbf16, #tpu.memory_space<vmem>>, vector<1x16x128xbf16>
    %87 = vector.shape_cast %86 : vector<1x16x128xbf16> to vector<16x128xbf16>
    %88 = vector.shape_cast %84 : vector<16x128xbf16> to vector<1x16x128xbf16>
    tpu.vector_store %arg4[%85, %c0_42, %c0_43], %88 {strides = array<i32>} : memref<8x16x128xbf16, #tpu.memory_space<vmem>>, vector<1x16x128xbf16>,
    %89 = arith.index_cast %c5_i32 : i32 to index
    %c0_44 = arith.constant 0 : index
    %c0_45 = arith.constant 0 : index
    %90 = vector.load %arg2[%89, %c0_44, %c0_45] : memref<8x16x128xbf16, #tpu.memory_space<vmem>>, vector<1x16x128xbf16>
    %91 = vector.shape_cast %90 : vector<1x16x128xbf16> to vector<16x128xbf16>
    %cst_46 = arith.constant dense<0.000000e+00> : vector<16x128xf32>
    %92 = tpu.matmul %91, %3, %cst_46 {dimension_numbers = #tpu.dot_dimension_numbers<[1], [1], [0], [0], [0, 0, 1, 0], [], []>} : vector<16x128xbf16>, vector<128x128xbf16>, vector<16x128xf32> -> vector<16x128xf32>
    %cst_47 = arith.constant 0.949999988 : f32
    %93 = vector.broadcast %cst_47 : f32 to vector<16x128xf32>
    %94 = arith.mulf %93, %80 : vector<16x128xf32>
    %95 = arith.addf %94, %92 : vector<16x128xf32>
    %c6_i32 = arith.constant 6 : i32
    %cst_48 = arith.constant 0.899999976 : f32
    %96 = vector.broadcast %cst_48 : f32 to vector<16x128xf32>
    %97 = arith.mulf %96, %83 : vector<16x128xf32>
    %98 = arith.addf %97, %95 : vector<16x128xf32>
    %99 = arith.truncf %98 : vector<16x128xf32> to vector<16x128xbf16>
    %100 = arith.index_cast %c6_i32 : i32 to index
    %c0_49 = arith.constant 0 : index
    %c0_50 = arith.constant 0 : index
    %101 = vector.load %arg4[%100, %c0_49, %c0_50] : memref<8x16x128xbf16, #tpu.memory_space<vmem>>, vector<1x16x128xbf16>
    %102 = vector.shape_cast %101 : vector<1x16x128xbf16> to vector<16x128xbf16>
    %103 = vector.shape_cast %99 : vector<16x128xbf16> to vector<1x16x128xbf16>
    tpu.vector_store %arg4[%100, %c0_49, %c0_50], %103 {strides = array<i32>} : memref<8x16x128xbf16, #tpu.memory_space<vmem>>, vector<1x16x128xbf16>,
    %104 = arith.index_cast %c6_i32 : i32 to index
    %c0_51 = arith.constant 0 : index
    %c0_52 = arith.constant 0 : index
    %105 = vector.load %arg2[%104, %c0_51, %c0_52] : memref<8x16x128xbf16, #tpu.memory_space<vmem>>, vector<1x16x128xbf16>
    %106 = vector.shape_cast %105 : vector<1x16x128xbf16> to vector<16x128xbf16>
    %cst_53 = arith.constant dense<0.000000e+00> : vector<16x128xf32>
    %107 = tpu.matmul %106, %3, %cst_53 {dimension_numbers = #tpu.dot_dimension_numbers<[1], [1], [0], [0], [0, 0, 1, 0], [], []>} : vector<16x128xbf16>, vector<128x128xbf16>, vector<16x128xf32> -> vector<16x128xf32>
    %cst_54 = arith.constant 0.949999988 : f32
    %108 = vector.broadcast %cst_54 : f32 to vector<16x128xf32>
    %109 = arith.mulf %108, %95 : vector<16x128xf32>
    %110 = arith.addf %109, %107 : vector<16x128xf32>
    %c7_i32 = arith.constant 7 : i32
    %cst_55 = arith.constant 0.899999976 : f32
    %111 = vector.broadcast %cst_55 : f32 to vector<16x128xf32>
    %112 = arith.mulf %111, %98 : vector<16x128xf32>
    %113 = arith.addf %112, %110 : vector<16x128xf32>
    %114 = arith.truncf %113 : vector<16x128xf32> to vector<16x128xbf16>
    %115 = arith.index_cast %c7_i32 : i32 to index
    %c0_56 = arith.constant 0 : index
    %c0_57 = arith.constant 0 : index
    %116 = vector.load %arg4[%115, %c0_56, %c0_57] : memref<8x16x128xbf16, #tpu.memory_space<vmem>>, vector<1x16x128xbf16>
    %117 = vector.shape_cast %116 : vector<1x16x128xbf16> to vector<16x128xbf16>
    %118 = vector.shape_cast %114 : vector<16x128xbf16> to vector<1x16x128xbf16>
    tpu.vector_store %arg4[%115, %c0_56, %c0_57], %118 {strides = array<i32>} : memref<8x16x128xbf16, #tpu.memory_space<vmem>>, vector<1x16x128xbf16>,
    %119 = arith.index_cast %c7_i32 : i32 to index
    %c0_58 = arith.constant 0 : index
    %c0_59 = arith.constant 0 : index
    %120 = vector.load %arg2[%119, %c0_58, %c0_59] : memref<8x16x128xbf16, #tpu.memory_space<vmem>>, vector<1x16x128xbf16>
    %121 = vector.shape_cast %120 : vector<1x16x128xbf16> to vector<16x128xbf16>
    %cst_60 = arith.constant dense<0.000000e+00> : vector<16x128xf32>
    %122 = tpu.matmul %121, %3, %cst_60 {dimension_numbers = #tpu.dot_dimension_numbers<[1], [1], [0], [0], [0, 0, 1, 0], [], []>} : vector<16x128xbf16>, vector<128x128xbf16>, vector<16x128xf32> -> vector<16x128xf32>
    %cst_61 = arith.constant 0.949999988 : f32
    %123 = vector.broadcast %cst_61 : f32 to vector<16x128xf32>
    %124 = arith.mulf %123, %110 : vector<16x128xf32>
    %125 = arith.addf %124, %122 : vector<16x128xf32>
    %c8_i32 = arith.constant 8 : i32
    %c0_62 = arith.constant 0 : index
    %c0_63 = arith.constant 0 : index
    %126 = vector.load %arg5[%c0_62, %c0_63] : memref<16x128xf32, #tpu.memory_space<vmem>>, vector<16x128xf32>
    tpu.vector_store %arg5[%c0_62, %c0_63], %125 {strides = array<i32>} : memref<16x128xf32, #tpu.memory_space<vmem>>, vector<16x128xf32>,
    %c0_64 = arith.constant 0 : index
    %c0_65 = arith.constant 0 : index
    %127 = vector.load %arg6[%c0_64, %c0_65] : memref<16x128xf32, #tpu.memory_space<vmem>>, vector<16x128xf32>
    tpu.vector_store %arg6[%c0_64, %c0_65], %113 {strides = array<i32>} : memref<16x128xf32, #tpu.memory_space<vmem>>, vector<16x128xf32>,
    return
  }
  func.func @transform_0(%arg0: i32, %arg1: i32) -> (i32, i32, i32) {
    %c0_i32 = arith.constant 0 : i32
    %c0_i32_0 = arith.constant 0 : i32
    return %arg1, %arg0, %c0_i32 : i32, i32, i32
  }
  func.func @transform_1(%arg0: i32, %arg1: i32) -> (i32, i32) {
    %c0_i32 = arith.constant 0 : i32
    %c0_i32_0 = arith.constant 0 : i32
    %c0_i32_1 = arith.constant 0 : i32
    return %c0_i32, %c0_i32_0 : i32, i32
  }
  func.func @transform_2(%arg0: i32, %arg1: i32) -> (i32, i32, i32) {
    %c0_i32 = arith.constant 0 : i32
    %c0_i32_0 = arith.constant 0 : i32
    return %arg1, %arg0, %c0_i32 : i32, i32, i32
  }
}

</mosaic_0001>

<llo_original>
// kernel: snn_readout_forward.1
$region0: #{snn_readout_forward.1}
  #allocation0 [shape = 'u32[]', space=smem, size = 0x4, offset = 0x4, fixed_abs, tag = 'smem constant byte address 0x4 - core index']
  #allocation1 [shape = 'u32[144,128]{1,0:T(1,128)}', space=vmem, size = 0x12000, scoped, tag = 'internal scratch']
  #allocation2 [shape = 'f32[16,128]{1,0:T(8,128)}', space=vmem, size = 0x2000, scoped, tag = 'scratch operand']
  #allocation3 [shape = 'f32[16,128]{1,0:T(8,128)}', space=vmem, size = 0x2000, scoped, tag = 'scratch operand']
  %s0 = inlined_call_operand.vmem [shape: bf16[8,16,128], index: 0, kind: input, shape index: {}]
  %s1 = inlined_call_operand.vmem [shape: bf16[128,128], index: 1, kind: input, shape index: {}]
  %s2 = inlined_call_operand.vmem [shape: bf16[8,16,128], index: 2, kind: output, shape index: {}]
  %s3 = sld [smem:[#allocation0]]
  $region22: #{snn_readout_forward.1} parent=0
    _
  %s5 = ssub.s32 1, %s3
  %s6 = scalar_select 0, %s5, %s3
  // Predicated region
  $region2: #{snn_readout_forward.1} parent=0 // pred_check
    _
  $region3: #{snn_readout_forward.1} parent=0 // pred_check_branch
    %8 = sbr.rel (0) target = $region5
  $region4: #{snn_readout_forward.1} parent=0 // pred_region
    _
  $region5: #{snn_readout_forward.1} parent=0 // pred_fallthru
    _
  // Predicated region
  $region6: #{snn_readout_forward.1} parent=0 // pred_check
    _
  $region7: #{snn_readout_forward.1} parent=0 // pred_check_branch
    %10 = sbr.rel (0) target = $region9
  $region8: #{snn_readout_forward.1} parent=0 // pred_region
    _
  $region9: #{snn_readout_forward.1} parent=0 // pred_fallthru
    _
  %p12 = scmp.eq.s32.totalorder 0, 0
  // Predicated region
  $region10: #{snn_readout_forward.1} parent=0 // pred_check
    %p13 = pneg %p12
  $region11: #{snn_readout_forward.1} parent=0 // pred_check_branch
    %15 = sbr.rel (%p13) target = $region13
  $region12: #{snn_readout_forward.1} parent=0 // pred_region
    %16 = vst [vmem:[#allocation2] sm:$0xff] 0.0
    %17 = vst [vmem:[#allocation2 + $0x8] sm:$0xff] 0.0
    %18 = vst [vmem:[#allocation3] sm:$0xff] 0.0
    %19 = vst [vmem:[#allocation3 + $0x8] sm:$0xff] 0.0
  $region13: #{snn_readout_forward.1} parent=0 // pred_fallthru
    _
  %v20 = vld [vmem:[%s1] sm:$0xf]
  %v21 = vld [vmem:[%s1 + $0x4] sm:$0xf]
  %v22 = vld [vmem:[%s1 + $0x8] sm:$0xf]
  %v23 = vld [vmem:[%s1 + $0xc] sm:$0xf]
  %v24 = vld [vmem:[%s1 + $0x10] sm:$0xf]
  %v25 = vld [vmem:[%s1 + $0x14] sm:$0xf]
  %v26 = vld [vmem:[%s1 + $0x18] sm:$0xf]
  %v27 = vld [vmem:[%s1 + $0x1c] sm:$0xf]
  %v28 = vld [vmem:[%s1 + $0x20] sm:$0xf]
  %v29 = vld [vmem:[%s1 + $0x24] sm:$0xf]
  %v30 = vld [vmem:[%s1 + $0x28] sm:$0xf]
  %v31 = vld [vmem:[%s1 + $0x2c] sm:$0xf]
  %v32 = vld [vmem:[%s1 + $0x30] sm:$0xf]
  %v33 = vld [vmem:[%s1 + $0x34] sm:$0xf]
  %v34 = vld [vmem:[%s1 + $0x38] sm:$0xf]
  %v35 = vld [vmem:[%s1 + $0x3c] sm:$0xf]
  %v36 = vld [vmem:[#allocation2] sm:$0xff]
  %v37 = vld [vmem:[#allocation2 + $0x8] sm:$0xff]
  %v38 = vld [vmem:[#allocation3] sm:$0xff]
  %v39 = vld [vmem:[#allocation3 + $0x8] sm:$0xff]
  %v40 = vmul.f32 %v38, 0.9
  %v41 = vmul.f32 %v39, 0.9
  %v42 = vadd.f32 %v40, %v36
  %v43 = vadd.f32 %v41, %v37
  %v44 = vpack.c.bf16 %v43, %v42
  %v46 = vunpack.c.l.b16 %v44
  %v47 = vunpack.c.h.b16 %v44
  %v48 = vpack.c.b16 %v46, %v46
  %v49 = vpack.c.b16 %v47, %v47
  %52 = vst [vmem:[%s2] sm:$0xf] %v48
  %53 = vst [vmem:[%s2 + $0x4] sm:$0xf] %v49
  %v54 = vld [vmem:[%s0] sm:$0xf]
  %v55 = vld [vmem:[%s0 + $0x4] sm:$0xf]
  %v58 = vunpack.c.l.b16 %v54
  %v59 = vunpack.c.l.b16 %v55
  %v60 = vpack.c.b16 %v59, %v58
  %v78 = vunpack.c.l.b16 %v20
  %v79 = vunpack.c.l.b16 %v21
  %v80 = vunpack.c.l.b16 %v22
  %v81 = vunpack.c.l.b16 %v23
  %v82 = vunpack.c.l.b16 %v24
  %v83 = vunpack.c.l.b16 %v25
  %v84 = vunpack.c.l.b16 %v26
  %v85 = vunpack.c.l.b16 %v27
  %v86 = vunpack.c.l.b16 %v28
  %v87 = vunpack.c.l.b16 %v29
  %v88 = vunpack.c.l.b16 %v30
  %v89 = vunpack.c.l.b16 %v31
  %v90 = vunpack.c.l.b16 %v32
  %v91 = vunpack.c.l.b16 %v33
  %v92 = vunpack.c.l.b16 %v34
  %v93 = vunpack.c.l.b16 %v35
  %v94 = vpack.c.b16 %v79, %v78
  %v95 = vpack.c.b16 %v81, %v80
  %v96 = vpack.c.b16 %v83, %v82
  %v97 = vpack.c.b16 %v85, %v84
  %v98 = vpack.c.b16 %v87, %v86
  %v99 = vpack.c.b16 %v89, %v88
  %v100 = vpack.c.b16 %v91, %v90
  %v101 = vpack.c.b16 %v93, %v92
  %110 = vmatprep.subr.bf16.mxu0 0
  %111 = vmatpush1.bf16.xpose.msra.mxu0 %v94
  %112 = vmatprep.subr.bf16.mxu0 0
  %113 = vmatpush1.bf16.xpose.msra.mxu0 %v95
  %114 = vmatprep.subr.bf16.mxu0 0
  %115 = vmatpush1.bf16.xpose.msra.mxu0 %v96
  %116 = vmatprep.subr.bf16.mxu0 0
  %117 = vmatpush1.bf16.xpose.msra.mxu0 %v97
  %118 = vmatprep.subr.bf16.mxu0 0
  %119 = vmatpush1.bf16.xpose.msra.mxu0 %v98
  %120 = vmatprep.subr.bf16.mxu0 0
  %121 = vmatpush1.bf16.xpose.msra.mxu0 %v99
  %122 = vmatprep.subr.bf16.mxu0 0
  %123 = vmatpush1.bf16.xpose.msra.mxu0 %v100
  %124 = vmatprep.subr.bf16.mxu0 0
  %125 = vmatpush1.bf16.xpose.msra.mxu0 %v101
  %126 = vmatprep.subr.bf16.mxu0 0
  %127 = vmatpush1.bf16.xpose.msra.mxu0 0
  %128 = vmatprep.subr.bf16.mxu0 0
  %129 = vmatpush1.bf16.xpose.msra.mxu0 0
  %130 = vmatprep.subr.bf16.mxu0 0
  %131 = vmatpush1.bf16.xpose.msra.mxu0 0
  %132 = vmatprep.subr.bf16.mxu0 0
  %133 = vmatpush1.bf16.xpose.msra.mxu0 0
  %134 = vmatprep.subr.bf16.mxu0 0
  %135 = vmatpush1.bf16.xpose.msra.mxu0 0
  %136 = vmatprep.subr.bf16.mxu0 0
  %137 = vmatpush1.bf16.xpose.msra.mxu0 0
  %138 = vmatprep.subr.bf16.mxu0 0
  %139 = vmatpush1.bf16.xpose.msra.mxu0 0
  %140 = vmatprep.subr.bf16.mxu0 0
  %141 = vmatpush1.bf16.xpose.msra.mxu0 0
  %142 = vmatprep.mubr.bf16.mxu0 0
  %143 = vmatmul.mubr.bf16.gmra.mrb[0].mxu0 %v60
  %v144 = vpop.f32.mrb[0].mxu0
  %v145 = vadd.f32 0.0, %v144
  %v146 = vpop.f32.mrb[0].mxu0
  %v147 = vpop.f32.mrb[0].mxu0
  %v148 = vadd.f32 0.0, %v147
  %v149 = vpop.f32.mrb[0].mxu0
  %150 = vdwg.mxu0
  %v151 = vmul.f32 %v36, 0.95
  %v152 = vmul.f32 %v37, 0.95
  %v153 = vadd.f32 %v151, %v145
  %v154 = vadd.f32 %v152, %v148
  %v155 = vmul.f32 %v42, 0.9
  %v156 = vmul.f32 %v43, 0.9
  %v157 = vadd.f32 %v155, %v153
  %v158 = vadd.f32 %v156, %v154
  %v159 = vpack.c.bf16 %v158, %v157
  %v161 = vunpack.c.l.b16 %v159
  %v162 = vunpack.c.h.b16 %v159
  %v163 = vpack.c.b16 %v161, %v161
  %v164 = vpack.c.b16 %v162, %v162
  %s167 = scalar_lea.vmem %s2, 8
  %168 = vst [vmem:[%s167] sm:$0xf] %v163
  %169 = vst [vmem:[%s167 + $0x4] sm:$0xf] %v164
  %s170 = scalar_lea.vmem %s0, 8
  %v171 = vld [vmem:[%s170] sm:$0xf]
  %v172 = vld [vmem:[%s170 + $0x4] sm:$0xf]
  %v175 = vunpack.c.l.b16 %v171
  %v176 = vunpack.c.l.b16 %v172
  %v177 = vpack.c.b16 %v176, %v175
  %179 = vmatprep.subr.bf16.mxu0 0
  %180 = vmatpush1.bf16.xpose.msra.mxu0 %v94
  %181 = vmatprep.subr.bf16.mxu0 0
  %182 = vmatpush1.bf16.xpose.msra.mxu0 %v95
  %183 = vmatprep.subr.bf16.mxu0 0
  %184 = vmatpush1.bf16.xpose.msra.mxu0 %v96
  %185 = vmatprep.subr.bf16.mxu0 0
  %186 = vmatpush1.bf16.xpose.msra.mxu0 %v97
  %187 = vmatprep.subr.bf16.mxu0 0
  %188 = vmatpush1.bf16.xpose.msra.mxu0 %v98
  %189 = vmatprep.subr.bf16.mxu0 0
  %190 = vmatpush1.bf16.xpose.msra.mxu0 %v99
  %191 = vmatprep.subr.bf16.mxu0 0
  %192 = vmatpush1.bf16.xpose.msra.mxu0 %v100
  %193 = vmatprep.subr.bf16.mxu0 0
  %194 = vmatpush1.bf16.xpose.msra.mxu0 %v101
  %195 = vmatprep.subr.bf16.mxu0 0
  %196 = vmatpush1.bf16.xpose.msra.mxu0 0
  %197 = vmatprep.subr.bf16.mxu0 0
  %198 = vmatpush1.bf16.xpose.msra.mxu0 0
  %199 = vmatprep.subr.bf16.mxu0 0
  %200 = vmatpush1.bf16.xpose.msra.mxu0 0
  %201 = vmatprep.subr.bf16.mxu0 0
  %202 = vmatpush1.bf16.xpose.msra.mxu0 0
  %203 = vmatprep.subr.bf16.mxu0 0
  %204 = vmatpush1.bf16.xpose.msra.mxu0 0
  %205 = vmatprep.subr.bf16.mxu0 0
  %206 = vmatpush1.bf16.xpose.msra.mxu0 0
  %207 = vmatprep.subr.bf16.mxu0 0
  %208 = vmatpush1.bf16.xpose.msra.mxu0 0
  %209 = vmatprep.subr.bf16.mxu0 0
  %210 = vmatpush1.bf16.xpose.msra.mxu0 0
  %211 = vmatprep.mubr.bf16.mxu0 0
  %212 = vmatmul.mubr.bf16.gmra.mrb[0].mxu0 %v177
  %v213 = vpop.f32.mrb[0].mxu0
  %v214 = vadd.f32 0.0, %v213
  %v215 = vpop.f32.mrb[0].mxu0
  %v216 = vpop.f32.mrb[0].mxu0
  %v217 = vadd.f32 0.0, %v216
  %v218 = vpop.f32.mrb[0].mxu0
  %219 = vdwg.mxu0
  %v220 = vmul.f32 %v153, 0.95
  %v221 = vmul.f32 %v154, 0.95
  %v222 = vadd.f32 %v220, %v214
  %v223 = vadd.f32 %v221, %v217
  %v224 = vmul.f32 %v157, 0.9
  %v225 = vmul.f32 %v158, 0.9
  %v226 = vadd.f32 %v224, %v222
  %v227 = vadd.f32 %v225, %v223
  %v228 = vpack.c.bf16 %v227, %v226
  %v230 = vunpack.c.l.b16 %v228
  %v231 = vunpack.c.h.b16 %v228
  %v232 = vpack.c.b16 %v230, %v230
  %v233 = vpack.c.b16 %v231, %v231
  %s236 = scalar_lea.vmem %s2, 16
  %237 = vst [vmem:[%s236] sm:$0xf] %v232
  %238 = vst [vmem:[%s236 + $0x4] sm:$0xf] %v233
  %s239 = scalar_lea.vmem %s0, 16
  %v240 = vld [vmem:[%s239] sm:$0xf]
  %v241 = vld [vmem:[%s239 + $0x4] sm:$0xf]
  %v244 = vunpack.c.l.b16 %v240
  %v245 = vunpack.c.l.b16 %v241
  %v246 = vpack.c.b16 %v245, %v244
  %248 = vmatprep.subr.bf16.mxu0 0
  %249 = vmatpush1.bf16.xpose.msra.mxu0 %v94
  %250 = vmatprep.subr.bf16.mxu0 0
  %251 = vmatpush1.bf16.xpose.msra.mxu0 %v95
  %252 = vmatprep.subr.bf16.mxu0 0
  %253 = vmatpush1.bf16.xpose.msra.mxu0 %v96
  %254 = vmatprep.subr.bf16.mxu0 0
  %255 = vmatpush1.bf16.xpose.msra.mxu0 %v97
  %256 = vmatprep.subr.bf16.mxu0 0
  %257 = vmatpush1.bf16.xpose.msra.mxu0 %v98
  %258 = vmatprep.subr.bf16.mxu0 0
  %259 = vmatpush1.bf16.xpose.msra.mxu0 %v99
  %260 = vmatprep.subr.bf16.mxu0 0
  %261 = vmatpush1.bf16.xpose.msra.mxu0 %v100
  %262 = vmatprep.subr.bf16.mxu0 0
  %263 = vmatpush1.bf16.xpose.msra.mxu0 %v101
  %264 = vmatprep.subr.bf16.mxu0 0
  %265 = vmatpush1.bf16.xpose.msra.mxu0 0
  %266 = vmatprep.subr.bf16.mxu0 0
  %267 = vmatpush1.bf16.xpose.msra.mxu0 0
  %268 = vmatprep.subr.bf16.mxu0 0
  %269 = vmatpush1.bf16.xpose.msra.mxu0 0
  %270 = vmatprep.subr.bf16.mxu0 0
  %271 = vmatpush1.bf16.xpose.msra.mxu0 0
  %272 = vmatprep.subr.bf16.mxu0 0
  %273 = vmatpush1.bf16.xpose.msra.mxu0 0
  %274 = vmatprep.subr.bf16.mxu0 0
  %275 = vmatpush1.bf16.xpose.msra.mxu0 0
  %276 = vmatprep.subr.bf16.mxu0 0
  %277 = vmatpush1.bf16.xpose.msra.mxu0 0
  %278 = vmatprep.subr.bf16.mxu0 0
  %279 = vmatpush1.bf16.xpose.msra.mxu0 0
  %280 = vmatprep.mubr.bf16.mxu0 0
  %281 = vmatmul.mubr.bf16.gmra.mrb[0].mxu0 %v246
  %v282 = vpop.f32.mrb[0].mxu0
  %v283 = vadd.f32 0.0, %v282
  %v284 = vpop.f32.mrb[0].mxu0
  %v285 = vpop.f32.mrb[0].mxu0
  %v286 = vadd.f32 0.0, %v285
  %v287 = vpop.f32.mrb[0].mxu0
  %288 = vdwg.mxu0
  %v289 = vmul.f32 %v222, 0.95
  %v290 = vmul.f32 %v223, 0.95
  %v291 = vadd.f32 %v289, %v283
  %v292 = vadd.f32 %v290, %v286
  %v293 = vmul.f32 %v226, 0.9
  %v294 = vmul.f32 %v227, 0.9
  %v295 = vadd.f32 %v293, %v291
  %v296 = vadd.f32 %v294, %v292
  %v297 = vpack.c.bf16 %v296, %v295
  %v299 = vunpack.c.l.b16 %v297
  %v300 = vunpack.c.h.b16 %v297
  %v301 = vpack.c.b16 %v299, %v299
  %v302 = vpack.c.b16 %v300, %v300
  %s305 = scalar_lea.vmem %s2, 24
  %306 = vst [vmem:[%s305] sm:$0xf] %v301
  %307 = vst [vmem:[%s305 + $0x4] sm:$0xf] %v302
  %s308 = scalar_lea.vmem %s0, 24
  %v309 = vld [vmem:[%s308] sm:$0xf]
  %v310 = vld [vmem:[%s308 + $0x4] sm:$0xf]
  %v313 = vunpack.c.l.b16 %v309
  %v314 = vunpack.c.l.b16 %v310
  %v315 = vpack.c.b16 %v314, %v313
  %317 = vmatprep.subr.bf16.mxu0 0
  %318 = vmatpush1.bf16.xpose.msra.mxu0 %v94
  %319 = vmatprep.subr.bf16.mxu0 0
  %320 = vmatpush1.bf16.xpose.msra.mxu0 %v95
  %321 = vmatprep.subr.bf16.mxu0 0
  %322 = vmatpush1.bf16.xpose.msra.mxu0 %v96
  %323 = vmatprep.subr.bf16.mxu0 0
  %324 = vmatpush1.bf16.xpose.msra.mxu0 %v97
  %325 = vmatprep.subr.bf16.mxu0 0
  %326 = vmatpush1.bf16.xpose.msra.mxu0 %v98
  %327 = vmatprep.subr.bf16.mxu0 0
  %328 = vmatpush1.bf16.xpose.msra.mxu0 %v99
  %329 = vmatprep.subr.bf16.mxu0 0
  %330 = vmatpush1.bf16.xpose.msra.mxu0 %v100
  %331 = vmatprep.subr.bf16.mxu0 0
  %332 = vmatpush1.bf16.xpose.msra.mxu0 %v101
  %333 = vmatprep.subr.bf16.mxu0 0
  %334 = vmatpush1.bf16.xpose.msra.mxu0 0
  %335 = vmatprep.subr.bf16.mxu0 0
  %336 = vmatpush1.bf16.xpose.msra.mxu0 0
  %337 = vmatprep.subr.bf16.mxu0 0
  %338 = vmatpush1.bf16.xpose.msra.mxu0 0
  %339 = vmatprep.subr.bf16.mxu0 0
  %340 = vmatpush1.bf16.xpose.msra.mxu0 0
  %341 = vmatprep.subr.bf16.mxu0 0
  %342 = vmatpush1.bf16.xpose.msra.mxu0 0
  %343 = vmatprep.subr.bf16.mxu0 0
  %344 = vmatpush1.bf16.xpose.msra.mxu0 0
  %345 = vmatprep.subr.bf16.mxu0 0
  %346 = vmatpush1.bf16.xpose.msra.mxu0 0
  %347 = vmatprep.subr.bf16.mxu0 0
  %348 = vmatpush1.bf16.xpose.msra.mxu0 0
  %349 = vmatprep.mubr.bf16.mxu0 0
  %350 = vmatmul.mubr.bf16.gmra.mrb[0].mxu0 %v315
  %v351 = vpop.f32.mrb[0].mxu0
  %v352 = vadd.f32 0.0, %v351
  %v353 = vpop.f32.mrb[0].mxu0
  %v354 = vpop.f32.mrb[0].mxu0
  %v355 = vadd.f32 0.0, %v354
  %v356 = vpop.f32.mrb[0].mxu0
  %357 = vdwg.mxu0
  %v358 = vmul.f32 %v291, 0.95
  %v359 = vmul.f32 %v292, 0.95
  %v360 = vadd.f32 %v358, %v352
  %v361 = vadd.f32 %v359, %v355
  %v362 = vmul.f32 %v295, 0.9
  %v363 = vmul.f32 %v296, 0.9
  %v364 = vadd.f32 %v362, %v360
  %v365 = vadd.f32 %v363, %v361
  %v366 = vpack.c.bf16 %v365, %v364
  %v368 = vunpack.c.l.b16 %v366
  %v369 = vunpack.c.h.b16 %v366
  %v370 = vpack.c.b16 %v368, %v368
  %v371 = vpack.c.b16 %v369, %v369
  %s374 = scalar_lea.vmem %s2, 32
  %375 = vst [vmem:[%s374] sm:$0xf] %v370
  %376 = vst [vmem:[%s374 + $0x4] sm:$0xf] %v371
  %s377 = scalar_lea.vmem %s0, 32
  %v378 = vld [vmem:[%s377] sm:$0xf]
  %v379 = vld [vmem:[%s377 + $0x4] sm:$0xf]
  %v382 = vunpack.c.l.b16 %v378
  %v383 = vunpack.c.l.b16 %v379
  %v384 = vpack.c.b16 %v383, %v382
  %386 = vmatprep.subr.bf16.mxu0 0
  %387 = vmatpush1.bf16.xpose.msra.mxu0 %v94
  %388 = vmatprep.subr.bf16.mxu0 0
  %389 = vmatpush1.bf16.xpose.msra.mxu0 %v95
  %390 = vmatprep.subr.bf16.mxu0 0
  %391 = vmatpush1.bf16.xpose.msra.mxu0 %v96
  %392 = vmatprep.subr.bf16.mxu0 0
  %393 = vmatpush1.bf16.xpose.msra.mxu0 %v97
  %394 = vmatprep.subr.bf16.mxu0 0
  %395 = vmatpush1.bf16.xpose.msra.mxu0 %v98
  %396 = vmatprep.subr.bf16.mxu0 0
  %397 = vmatpush1.bf16.xpose.msra.mxu0 %v99
  %398 = vmatprep.subr.bf16.mxu0 0
  %399 = vmatpush1.bf16.xpose.msra.mxu0 %v100
  %400 = vmatprep.subr.bf16.mxu0 0
  %401 = vmatpush1.bf16.xpose.msra.mxu0 %v101
  %402 = vmatprep.subr.bf16.mxu0 0
  %403 = vmatpush1.bf16.xpose.msra.mxu0 0
  %404 = vmatprep.subr.bf16.mxu0 0
  %405 = vmatpush1.bf16.xpose.msra.mxu0 0
  %406 = vmatprep.subr.bf16.mxu0 0
  %407 = vmatpush1.bf16.xpose.msra.mxu0 0
  %408 = vmatprep.subr.bf16.mxu0 0
  %409 = vmatpush1.bf16.xpose.msra.mxu0 0
  %410 = vmatprep.subr.bf16.mxu0 0
  %411 = vmatpush1.bf16.xpose.msra.mxu0 0
  %412 = vmatprep.subr.bf16.mxu0 0
  %413 = vmatpush1.bf16.xpose.msra.mxu0 0
  %414 = vmatprep.subr.bf16.mxu0 0
  %415 = vmatpush1.bf16.xpose.msra.mxu0 0
  %416 = vmatprep.subr.bf16.mxu0 0
  %417 = vmatpush1.bf16.xpose.msra.mxu0 0
  %418 = vmatprep.mubr.bf16.mxu0 0
  %419 = vmatmul.mubr.bf16.gmra.mrb[0].mxu0 %v384
  %v420 = vpop.f32.mrb[0].mxu0
  %v421 = vadd.f32 0.0, %v420
  %v422 = vpop.f32.mrb[0].mxu0
  %v423 = vpop.f32.mrb[0].mxu0
  %v424 = vadd.f32 0.0, %v423
  %v425 = vpop.f32.mrb[0].mxu0
  %426 = vdwg.mxu0
  %v427 = vmul.f32 %v360, 0.95
  %v428 = vmul.f32 %v361, 0.95
  %v429 = vadd.f32 %v427, %v421
  %v430 = vadd.f32 %v428, %v424
  %v431 = vmul.f32 %v364, 0.9
  %v432 = vmul.f32 %v365, 0.9
  %v433 = vadd.f32 %v431, %v429
  %v434 = vadd.f32 %v432, %v430
  %v435 = vpack.c.bf16 %v434, %v433
  %v437 = vunpack.c.l.b16 %v435
  %v438 = vunpack.c.h.b16 %v435
  %v439 = vpack.c.b16 %v437, %v437
  %v440 = vpack.c.b16 %v438, %v438
  %s443 = scalar_lea.vmem %s2, 40
  %444 = vst [vmem:[%s443] sm:$0xf] %v439
  %445 = vst [vmem:[%s443 + $0x4] sm:$0xf] %v440
  %s446 = scalar_lea.vmem %s0, 40
  %v447 = vld [vmem:[%s446] sm:$0xf]
  %v448 = vld [vmem:[%s446 + $0x4] sm:$0xf]
  %v451 = vunpack.c.l.b16 %v447
  %v452 = vunpack.c.l.b16 %v448
  %v453 = vpack.c.b16 %v452, %v451
  %455 = vmatprep.subr.bf16.mxu0 0
  %456 = vmatpush1.bf16.xpose.msra.mxu0 %v94
  %457 = vmatprep.subr.bf16.mxu0 0
  %458 = vmatpush1.bf16.xpose.msra.mxu0 %v95
  %459 = vmatprep.subr.bf16.mxu0 0
  %460 = vmatpush1.bf16.xpose.msra.mxu0 %v96
  %461 = vmatprep.subr.bf16.mxu0 0
  %462 = vmatpush1.bf16.xpose.msra.mxu0 %v97
  %463 = vmatprep.subr.bf16.mxu0 0
  %464 = vmatpush1.bf16.xpose.msra.mxu0 %v98
  %465 = vmatprep.subr.bf16.mxu0 0
  %466 = vmatpush1.bf16.xpose.msra.mxu0 %v99
  %467 = vmatprep.subr.bf16.mxu0 0
  %468 = vmatpush1.bf16.xpose.msra.mxu0 %v100
  %469 = vmatprep.subr.bf16.mxu0 0
  %470 = vmatpush1.bf16.xpose.msra.mxu0 %v101
  %471 = vmatprep.subr.bf16.mxu0 0
  %472 = vmatpush1.bf16.xpose.msra.mxu0 0
  %473 = vmatprep.subr.bf16.mxu0 0
  %474 = vmatpush1.bf16.xpose.msra.mxu0 0
  %475 = vmatprep.subr.bf16.mxu0 0
  %476 = vmatpush1.bf16.xpose.msra.mxu0 0
  %477 = vmatprep.subr.bf16.mxu0 0
  %478 = vmatpush1.bf16.xpose.msra.mxu0 0
  %479 = vmatprep.subr.bf16.mxu0 0
  %480 = vmatpush1.bf16.xpose.msra.mxu0 0
  %481 = vmatprep.subr.bf16.mxu0 0
  %482 = vmatpush1.bf16.xpose.msra.mxu0 0
  %483 = vmatprep.subr.bf16.mxu0 0
  %484 = vmatpush1.bf16.xpose.msra.mxu0 0
  %485 = vmatprep.subr.bf16.mxu0 0
  %486 = vmatpush1.bf16.xpose.msra.mxu0 0
  %487 = vmatprep.mubr.bf16.mxu0 0
  %488 = vmatmul.mubr.bf16.gmra.mrb[0].mxu0 %v453
  %v489 = vpop.f32.mrb[0].mxu0
  %v490 = vadd.f32 0.0, %v489
  %v491 = vpop.f32.mrb[0].mxu0
  %v492 = vpop.f32.mrb[0].mxu0
  %v493 = vadd.f32 0.0, %v492
  %v494 = vpop.f32.mrb[0].mxu0
  %495 = vdwg.mxu0
  %v496 = vmul.f32 %v429, 0.95
  %v497 = vmul.f32 %v430, 0.95
  %v498 = vadd.f32 %v496, %v490
  %v499 = vadd.f32 %v497, %v493
  %v500 = vmul.f32 %v433, 0.9
  %v501 = vmul.f32 %v434, 0.9
  %v502 = vadd.f32 %v500, %v498
  %v503 = vadd.f32 %v501, %v499
  %v504 = vpack.c.bf16 %v503, %v502
  %v506 = vunpack.c.l.b16 %v504
  %v507 = vunpack.c.h.b16 %v504
  %v508 = vpack.c.b16 %v506, %v506
  %v509 = vpack.c.b16 %v507, %v507
  %s512 = scalar_lea.vmem %s2, 48
  %513 = vst [vmem:[%s512] sm:$0xf] %v508
  %514 = vst [vmem:[%s512 + $0x4] sm:$0xf] %v509
  %s515 = scalar_lea.vmem %s0, 48
  %v516 = vld [vmem:[%s515] sm:$0xf]
  %v517 = vld [vmem:[%s515 + $0x4] sm:$0xf]
  %v520 = vunpack.c.l.b16 %v516
  %v521 = vunpack.c.l.b16 %v517
  %v522 = vpack.c.b16 %v521, %v520
  %524 = vmatprep.subr.bf16.mxu0 0
  %525 = vmatpush1.bf16.xpose.msra.mxu0 %v94
  %526 = vmatprep.subr.bf16.mxu0 0
  %527 = vmatpush1.bf16.xpose.msra.mxu0 %v95
  %528 = vmatprep.subr.bf16.mxu0 0
  %529 = vmatpush1.bf16.xpose.msra.mxu0 %v96
  %530 = vmatprep.subr.bf16.mxu0 0
  %531 = vmatpush1.bf16.xpose.msra.mxu0 %v97
  %532 = vmatprep.subr.bf16.mxu0 0
  %533 = vmatpush1.bf16.xpose.msra.mxu0 %v98
  %534 = vmatprep.subr.bf16.mxu0 0
  %535 = vmatpush1.bf16.xpose.msra.mxu0 %v99
  %536 = vmatprep.subr.bf16.mxu0 0
  %537 = vmatpush1.bf16.xpose.msra.mxu0 %v100
  %538 = vmatprep.subr.bf16.mxu0 0
  %539 = vmatpush1.bf16.xpose.msra.mxu0 %v101
  %540 = vmatprep.subr.bf16.mxu0 0
  %541 = vmatpush1.bf16.xpose.msra.mxu0 0
  %542 = vmatprep.subr.bf16.mxu0 0
  %543 = vmatpush1.bf16.xpose.msra.mxu0 0
  %544 = vmatprep.subr.bf16.mxu0 0
  %545 = vmatpush1.bf16.xpose.msra.mxu0 0
  %546 = vmatprep.subr.bf16.mxu0 0
  %547 = vmatpush1.bf16.xpose.msra.mxu0 0
  %548 = vmatprep.subr.bf16.mxu0 0
  %549 = vmatpush1.bf16.xpose.msra.mxu0 0
  %550 = vmatprep.subr.bf16.mxu0 0
  %551 = vmatpush1.bf16.xpose.msra.mxu0 0
  %552 = vmatprep.subr.bf16.mxu0 0
  %553 = vmatpush1.bf16.xpose.msra.mxu0 0
  %554 = vmatprep.subr.bf16.mxu0 0
  %555 = vmatpush1.bf16.xpose.msra.mxu0 0
  %556 = vmatprep.mubr.bf16.mxu0 0
  %557 = vmatmul.mubr.bf16.gmra.mrb[0].mxu0 %v522
  %v558 = vpop.f32.mrb[0].mxu0
  %v559 = vadd.f32 0.0, %v558
  %v560 = vpop.f32.mrb[0].mxu0
  %v561 = vpop.f32.mrb[0].mxu0
  %v562 = vadd.f32 0.0, %v561
  %v563 = vpop.f32.mrb[0].mxu0
  %564 = vdwg.mxu0
  %v565 = vmul.f32 %v498, 0.95
  %v566 = vmul.f32 %v499, 0.95
  %v567 = vadd.f32 %v565, %v559
  %v568 = vadd.f32 %v566, %v562
  %v569 = vmul.f32 %v502, 0.9
  %v570 = vmul.f32 %v503, 0.9
  %v571 = vadd.f32 %v569, %v567
  %v572 = vadd.f32 %v570, %v568
  %v573 = vpack.c.bf16 %v572, %v571
  %v575 = vunpack.c.l.b16 %v573
  %v576 = vunpack.c.h.b16 %v573
  %v577 = vpack.c.b16 %v575, %v575
  %v578 = vpack.c.b16 %v576, %v576
  %s581 = scalar_lea.vmem %s2, 56
  %582 = vst [vmem:[%s581] sm:$0xf] %v577
  %583 = vst [vmem:[%s581 + $0x4] sm:$0xf] %v578
  %s584 = scalar_lea.vmem %s0, 56
  %v585 = vld [vmem:[%s584] sm:$0xf]
  %v586 = vld [vmem:[%s584 + $0x4] sm:$0xf]
  %v589 = vunpack.c.l.b16 %v585
  %v590 = vunpack.c.l.b16 %v586
  %v591 = vpack.c.b16 %v590, %v589
  %593 = vmatprep.subr.bf16.mxu0 0
  %594 = vmatpush1.bf16.xpose.msra.mxu0 %v94
  %595 = vmatprep.subr.bf16.mxu0 0
  %596 = vmatpush1.bf16.xpose.msra.mxu0 %v95
  %597 = vmatprep.subr.bf16.mxu0 0
  %598 = vmatpush1.bf16.xpose.msra.mxu0 %v96
  %599 = vmatprep.subr.bf16.mxu0 0
  %600 = vmatpush1.bf16.xpose.msra.mxu0 %v97
  %601 = vmatprep.subr.bf16.mxu0 0
  %602 = vmatpush1.bf16.xpose.msra.mxu0 %v98
  %603 = vmatprep.subr.bf16.mxu0 0
  %604 = vmatpush1.bf16.xpose.msra.mxu0 %v99
  %605 = vmatprep.subr.bf16.mxu0 0
  %606 = vmatpush1.bf16.xpose.msra.mxu0 %v100
  %607 = vmatprep.subr.bf16.mxu0 0
  %608 = vmatpush1.bf16.xpose.msra.mxu0 %v101
  %609 = vmatprep.subr.bf16.mxu0 0
  %610 = vmatpush1.bf16.xpose.msra.mxu0 0
  %611 = vmatprep.subr.bf16.mxu0 0
  %612 = vmatpush1.bf16.xpose.msra.mxu0 0
  %613 = vmatprep.subr.bf16.mxu0 0
  %614 = vmatpush1.bf16.xpose.msra.mxu0 0
  %615 = vmatprep.subr.bf16.mxu0 0
  %616 = vmatpush1.bf16.xpose.msra.mxu0 0
  %617 = vmatprep.subr.bf16.mxu0 0
  %618 = vmatpush1.bf16.xpose.msra.mxu0 0
  %619 = vmatprep.subr.bf16.mxu0 0
  %620 = vmatpush1.bf16.xpose.msra.mxu0 0
  %621 = vmatprep.subr.bf16.mxu0 0
  %622 = vmatpush1.bf16.xpose.msra.mxu0 0
  %623 = vmatprep.subr.bf16.mxu0 0
  %624 = vmatpush1.bf16.xpose.msra.mxu0 0
  %625 = vmatprep.mubr.bf16.mxu0 0
  %626 = vmatmul.mubr.bf16.gmra.mrb[0].mxu0 %v591
  %v627 = vpop.f32.mrb[0].mxu0
  %v628 = vadd.f32 0.0, %v627
  %v629 = vpop.f32.mrb[0].mxu0
  %v630 = vpop.f32.mrb[0].mxu0
  %v631 = vadd.f32 0.0, %v630
  %v632 = vpop.f32.mrb[0].mxu0
  %633 = vdwg.mxu0
  %v634 = vmul.f32 %v567, 0.95
  %v635 = vmul.f32 %v568, 0.95
  %v636 = vadd.f32 %v634, %v628
  %v637 = vadd.f32 %v635, %v631
  %638 = vst [vmem:[#allocation2] sm:$0xff] %v636
  %639 = vst [vmem:[#allocation2 + $0x8] sm:$0xff] %v637
  %640 = vst [vmem:[#allocation3] sm:$0xff] %v571
  %641 = vst [vmem:[#allocation3 + $0x8] sm:$0xff] %v572
  // Predicated region
  $region14: #{snn_readout_forward.1} parent=0 // pred_check
    _
  $region15: #{snn_readout_forward.1} parent=0 // pred_check_branch
    %643 = sbr.rel (0) target = $region17
  $region16: #{snn_readout_forward.1} parent=0 // pred_region
    _
  $region17: #{snn_readout_forward.1} parent=0 // pred_fallthru
    _
  // Predicated region
  $region18: #{snn_readout_forward.1} parent=0 // pred_check
    _
  $region19: #{snn_readout_forward.1} parent=0 // pred_check_branch
    %645 = sbr.rel (0) target = $region21
  $region20: #{snn_readout_forward.1} parent=0 // pred_region
    _
  $region21: #{snn_readout_forward.1} parent=0 // pred_fallthru
    _

</llo_original>
